<compile_context>
chip_gen: v6e
topology: v6e:2x2x1
jax: 0.10.0
libtpu: 0.0.40
codegen_flags: <defaults>
</compile_context>

<pallas_src>
import functools

import jax
import jax.numpy as jnp
from jax.experimental import pallas as pl
from jax.experimental.pallas import tpu as pltpu

LANE = 128          # vreg lane width (fast axis)
BF16_SUBLANE = 16   # rows per bf16 vreg (sublane pack)


def _round_up(v, m):
    return ((v + m - 1) // m) * m


def _actor_kernel(x_ref, w1_ref, b1_ref, w2_ref, b2_ref, w3_ref, b3_ref, o_ref):
    """Fused 3-layer MLP tile. x arrives f32 and is cast to bf16 in-kernel;
    all accumulation (preferred_element_type=f32), bias adds, relu and tanh
    stay f32."""
    x = x_ref[...].astype(jnp.bfloat16)                                   # (tile, S)
    h1 = jnp.dot(x, w1_ref[...], preferred_element_type=jnp.float32) + b1_ref[...]
    h1 = jnp.maximum(h1, 0.0).astype(jnp.bfloat16)                        # (tile, Hp)
    h2 = jnp.dot(h1, w2_ref[...], preferred_element_type=jnp.float32) + b2_ref[...]
    h2 = jnp.maximum(h2, 0.0).astype(jnp.bfloat16)                        # (tile, Hp)
    h3 = jnp.dot(h2, w3_ref[...], preferred_element_type=jnp.float32) + b3_ref[...]
    o_ref[...] = jnp.tanh(h3).astype(o_ref.dtype)                         # (tile, A)


def prepare_actor_params(params):
    """One-time prep (outside jit): transpose to (in, out), cast weights to
    bf16, keep biases f32 as (1, out), and pad the HIDDEN dimension to a
    lane-dense multiple of 128 (zero padding is exact through relu).
    The output (action) dimension is NOT padded."""
    w1 = jnp.asarray(params["w1"]).T.astype(jnp.bfloat16)   # (state_dim, hidden)
    w2 = jnp.asarray(params["w2"]).T.astype(jnp.bfloat16)   # (hidden, hidden)
    w3 = jnp.asarray(params["w3"]).T.astype(jnp.bfloat16)   # (hidden, action_dim)
    b1 = jnp.asarray(params["b1"]).reshape(1, -1).astype(jnp.float32)
    b2 = jnp.asarray(params["b2"]).reshape(1, -1).astype(jnp.float32)
    b3 = jnp.asarray(params["b3"]).reshape(1, -1).astype(jnp.float32)

    hidden = w1.shape[1]
    hp = _round_up(hidden, LANE)
    if hp != hidden:
        d = hp - hidden
        w1 = jnp.pad(w1, ((0, 0), (0, d)))   # extra h1 cols -> relu(0 + 0) = 0
        b1 = jnp.pad(b1, ((0, 0), (0, d)))
        w2 = jnp.pad(w2, ((0, d), (0, d)))   # extra rows hit zero h1 cols
        b2 = jnp.pad(b2, ((0, 0), (0, d)))
        w3 = jnp.pad(w3, ((0, d), (0, 0)))   # extra rows hit zero h2 cols

    return {"w1": w1, "b1": b1, "w2": w2, "b2": b2, "w3": w3, "b3": b3}


def _choose_tile(B, max_batch_tile):
    """Batch tile: multiple of 16 (bf16 sublane pack). Small batches take one
    grid step; large batches always get >= 2 steps so both v7x TensorCores
    run and the activation DMAs pipeline against compute."""
    if B <= 512:
        return _round_up(B, BF16_SUBLANE)
    return min(max_batch_tile, _round_up((B + 1) // 2, 256))


@functools.partial(jax.jit, static_argnames=("max_batch_tile",))
def actor_forward(x, prep, max_batch_tile=512):
    """x: (B, state_dim) float32. prep: output of prepare_actor_params."""
    B, state_dim = x.shape
    hidden_p = prep["w1"].shape[1]          # lane-dense padded hidden
    action_dim = prep["w3"].shape[1]        # real (un-padded) action width

    tile = _choose_tile(B, max_batch_tile)
    B_pad = _round_up(B, tile)
    if B_pad != B:
        x = jnp.pad(x, ((0, B_pad - B), (0, 0)))
    grid = (B_pad // tile,)

    flops = 2 * B_pad * (state_dim * hidden_p
                         + hidden_p * hidden_p
                         + hidden_p * action_dim)
    bytes_accessed = (
        B_pad * state_dim * 4                                            # x (f32)
        + (prep["w1"].size + prep["w2"].size + prep["w3"].size) * 2      # weights (bf16)
        + (prep["b1"].size + prep["b2"].size + prep["b3"].size) * 4      # biases (f32)
        + B_pad * action_dim * 4                                         # output (f32)
    )
    cost = pl.CostEstimate(flops=flops,
                           transcendentals=B_pad * action_dim,
                           bytes_accessed=bytes_accessed)

    out = pl.pallas_call(
        _actor_kernel,
        out_shape=jax.ShapeDtypeStruct((B_pad, action_dim), jnp.float32),
        grid=grid,
        in_specs=[
            # activations: tiled over the batch (f32, cast in-kernel)
            pl.BlockSpec((tile, state_dim), lambda i: (i, 0)),
            # weights / biases: full arrays, VMEM-resident across the grid
            pl.BlockSpec((state_dim, hidden_p), lambda i: (0, 0)),
            pl.BlockSpec((1, hidden_p), lambda i: (0, 0)),
            pl.BlockSpec((hidden_p, hidden_p), lambda i: (0, 0)),
            pl.BlockSpec((1, hidden_p), lambda i: (0, 0)),
            pl.BlockSpec((hidden_p, action_dim), lambda i: (0, 0)),
            pl.BlockSpec((1, action_dim), lambda i: (0, 0)),
        ],
        # un-padded output block: writeback DMA only moves the real columns
        out_specs=pl.BlockSpec((tile, action_dim), lambda i: (i, 0)),
        compiler_params=pltpu.CompilerParams(
            dimension_semantics=("parallel",),
        ),
        cost_estimate=cost,
    )(x, prep["w1"], prep["b1"], prep["w2"], prep["b2"], prep["w3"], prep["b3"])

    return out[:B]


def init_actor_params(key, state_dim, action_dim, hidden_size=64):
    """Deterministic init matching nn.Linear shapes (W: (out, in), b: (out,)),
    PyTorch default U(-1/sqrt(fan_in), 1/sqrt(fan_in))."""
    ks = jax.random.split(key, 6)

    def lin(kw, kb, fan_in, fan_out):
        bound = 1.0 / jnp.sqrt(fan_in)
        w = jax.random.uniform(kw, (fan_out, fan_in), jnp.float32, -bound, bound)
        b = jax.random.uniform(kb, (fan_out,), jnp.float32, -bound, bound)
        return w, b

    w1, b1 = lin(ks[0], ks[1], state_dim, hidden_size)
    w2, b2 = lin(ks[2], ks[3], hidden_size, hidden_size)
    w3, b3 = lin(ks[4], ks[5], hidden_size, action_dim)
    return {"w1": w1, "b1": b1, "w2": w2, "b2": b2, "w3": w3, "b3": b3}


def actor_forward_ref(x, p):
    h1 = jnp.maximum(x @ p["w1"].T + p["b1"], 0.0)
    h2 = jnp.maximum(h1 @ p["w2"].T + p["b2"], 0.0)
    return jnp.tanh(h2 @ p["w3"].T + p["b3"])


if __name__ == "__main__":
    key = jax.random.PRNGKey(0)
    k_x, k_p = jax.random.split(key)

    batch, state_dim, action_dim, hidden = 2, 16, 8, 64
    x = jax.random.normal(k_x, (batch, state_dim), jnp.float32)
    params = init_actor_params(k_p, state_dim, action_dim, hidden)

    prep = prepare_actor_params(params)
    y = jax.block_until_ready(actor_forward(x, prep))

    y_ref = actor_forward_ref(x, params)
    assert y.shape == (batch, action_dim)
    # bf16 weights/activations -> loosened tolerance vs f32 reference.
    assert jnp.allclose(y, y_ref, atol=3e-2, rtol=3e-2), "mismatch vs reference"

    print("KERNEL_OK")
</pallas_src>

<mosaic_0001>
module attributes {stable_mosaic.version = 11 : i64} {
  func.func @_actor_kernel(%arg0: i32, %arg1: memref<16x16xf32, #tpu.memory_space<vmem>>, %arg2: memref<16x128xbf16, #tpu.memory_space<vmem>>, %arg3: memref<1x128xf32, #tpu.memory_space<vmem>>, %arg4: memref<128x128xbf16, #tpu.memory_space<vmem>>, %arg5: memref<1x128xf32, #tpu.memory_space<vmem>>, %arg6: memref<128x8xbf16, #tpu.memory_space<vmem>>, %arg7: memref<1x8xf32, #tpu.memory_space<vmem>>, %arg8: memref<16x8xf32, #tpu.memory_space<vmem>>) attributes {dimension_semantics = [#tpu.dimension_semantics<parallel>], iteration_bounds = array<i64: 1>, scalar_prefetch = 0 : i64, scratch_operands = 0 : i64, tpu.core_type = #tpu.core_type<tc>, window_params = [{transform_indices = @transform_0, window_bounds = array<i64: 16, 16>}, {pipeline_mode = #tpu.pipeline_mode<synchronous>, transform_indices = @transform_1, window_bounds = array<i64: 16, 128>}, {pipeline_mode = #tpu.pipeline_mode<synchronous>, transform_indices = @transform_2, window_bounds = array<i64: 1, 128>}, {pipeline_mode = #tpu.pipeline_mode<synchronous>, transform_indices = @transform_3, window_bounds = array<i64: 128, 128>}, {pipeline_mode = #tpu.pipeline_mode<synchronous>, transform_indices = @transform_4, window_bounds = array<i64: 1, 128>}, {pipeline_mode = #tpu.pipeline_mode<synchronous>, transform_indices = @transform_5, window_bounds = array<i64: 128, 8>}, {pipeline_mode = #tpu.pipeline_mode<synchronous>, transform_indices = @transform_6, window_bounds = array<i64: 1, 8>}, {transform_indices = @transform_7, window_bounds = array<i64: 16, 8>}]} {
    %c0 = arith.constant 0 : index
    %c0_0 = arith.constant 0 : index
    %0 = vector.load %arg1[%c0, %c0_0] : memref<16x16xf32, #tpu.memory_space<vmem>>, vector<16x16xf32>
    %1 = arith.truncf %0 : vector<16x16xf32> to vector<16x16xbf16>
    %c0_1 = arith.constant 0 : index
    %c0_2 = arith.constant 0 : index
    %2 = vector.load %arg2[%c0_1, %c0_2] : memref<16x128xbf16, #tpu.memory_space<vmem>>, vector<16x128xbf16>
    %cst = arith.constant dense<0.000000e+00> : vector<16x128xf32>
    %3 = tpu.matmul %1, %2, %cst {dimension_numbers = #tpu.dot_dimension_numbers<[1], [0], [0], [1], [0, 0, 1, 1], [], []>} : vector<16x16xbf16>, vector<16x128xbf16>, vector<16x128xf32> -> vector<16x128xf32>
    %c0_3 = arith.constant 0 : index
    %c0_4 = arith.constant 0 : index
    %4 = vector.load %arg3[%c0_3, %c0_4] : memref<1x128xf32, #tpu.memory_space<vmem>>, vector<1x128xf32>
    %5 = vector.broadcast %4 : vector<1x128xf32> to vector<16x128xf32>
    %6 = arith.addf %3, %5 : vector<16x128xf32>
    %cst_5 = arith.constant 0.000000e+00 : f32
    %7 = vector.broadcast %cst_5 : f32 to vector<16x128xf32>
    %8 = arith.maximumf %6, %7 : vector<16x128xf32>
    %9 = arith.truncf %8 : vector<16x128xf32> to vector<16x128xbf16>
    %c0_6 = arith.constant 0 : index
    %c0_7 = arith.constant 0 : index
    %10 = vector.load %arg4[%c0_6, %c0_7] : memref<128x128xbf16, #tpu.memory_space<vmem>>, vector<128x128xbf16>
    %cst_8 = arith.constant dense<0.000000e+00> : vector<16x128xf32>
    %11 = tpu.matmul %9, %10, %cst_8 {dimension_numbers = #tpu.dot_dimension_numbers<[1], [0], [0], [1], [0, 0, 1, 1], [], []>} : vector<16x128xbf16>, vector<128x128xbf16>, vector<16x128xf32> -> vector<16x128xf32>
    %c0_9 = arith.constant 0 : index
    %c0_10 = arith.constant 0 : index
    %12 = vector.load %arg5[%c0_9, %c0_10] : memref<1x128xf32, #tpu.memory_space<vmem>>, vector<1x128xf32>
    %13 = vector.broadcast %12 : vector<1x128xf32> to vector<16x128xf32>
    %14 = arith.addf %11, %13 : vector<16x128xf32>
    %cst_11 = arith.constant 0.000000e+00 : f32
    %15 = vector.broadcast %cst_11 : f32 to vector<16x128xf32>
    %16 = arith.maximumf %14, %15 : vector<16x128xf32>
    %17 = arith.truncf %16 : vector<16x128xf32> to vector<16x128xbf16>
    %c0_12 = arith.constant 0 : index
    %c0_13 = arith.constant 0 : index
    %18 = vector.load %arg6[%c0_12, %c0_13] : memref<128x8xbf16, #tpu.memory_space<vmem>>, vector<128x8xbf16>
    %cst_14 = arith.constant dense<0.000000e+00> : vector<16x8xf32>
    %19 = tpu.matmul %17, %18, %cst_14 {dimension_numbers = #tpu.dot_dimension_numbers<[1], [0], [0], [1], [0, 0, 1, 1], [], []>} : vector<16x128xbf16>, vector<128x8xbf16>, vector<16x8xf32> -> vector<16x8xf32>
    %c0_15 = arith.constant 0 : index
    %c0_16 = arith.constant 0 : index
    %20 = vector.load %arg7[%c0_15, %c0_16] : memref<1x8xf32, #tpu.memory_space<vmem>>, vector<1x8xf32>
    %21 = vector.broadcast %20 : vector<1x8xf32> to vector<16x8xf32>
    %22 = arith.addf %19, %21 : vector<16x8xf32>
    %23 = math.tanh %22 : vector<16x8xf32>
    %c0_17 = arith.constant 0 : index
    %c0_18 = arith.constant 0 : index
    %24 = vector.load %arg8[%c0_17, %c0_18] : memref<16x8xf32, #tpu.memory_space<vmem>>, vector<16x8xf32>
    tpu.vector_store %arg8[%c0_17, %c0_18], %23 {strides = array<i32>} : memref<16x8xf32, #tpu.memory_space<vmem>>, vector<16x8xf32>,
    return
  }
  func.func @transform_0(%arg0: i32) -> (i32, i32) {
    %c0_i32 = arith.constant 0 : i32
    %c0_i32_0 = arith.constant 0 : i32
    return %arg0, %c0_i32 : i32, i32
  }
  func.func @transform_1(%arg0: i32) -> (i32, i32) {
    %c0_i32 = arith.constant 0 : i32
    %c0_i32_0 = arith.constant 0 : i32
    %c0_i32_1 = arith.constant 0 : i32
    return %c0_i32, %c0_i32_0 : i32, i32
  }
  func.func @transform_2(%arg0: i32) -> (i32, i32) {
    %c0_i32 = arith.constant 0 : i32
    %c0_i32_0 = arith.constant 0 : i32
    %c0_i32_1 = arith.constant 0 : i32
    return %c0_i32, %c0_i32_0 : i32, i32
  }
  func.func @transform_3(%arg0: i32) -> (i32, i32) {
    %c0_i32 = arith.constant 0 : i32
    %c0_i32_0 = arith.constant 0 : i32
    %c0_i32_1 = arith.constant 0 : i32
    return %c0_i32, %c0_i32_0 : i32, i32
  }
  func.func @transform_4(%arg0: i32) -> (i32, i32) {
    %c0_i32 = arith.constant 0 : i32
    %c0_i32_0 = arith.constant 0 : i32
    %c0_i32_1 = arith.constant 0 : i32
    return %c0_i32, %c0_i32_0 : i32, i32
  }
  func.func @transform_5(%arg0: i32) -> (i32, i32) {
    %c0_i32 = arith.constant 0 : i32
    %c0_i32_0 = arith.constant 0 : i32
    %c0_i32_1 = arith.constant 0 : i32
    return %c0_i32, %c0_i32_0 : i32, i32
  }
  func.func @transform_6(%arg0: i32) -> (i32, i32) {
    %c0_i32 = arith.constant 0 : i32
    %c0_i32_0 = arith.constant 0 : i32
    %c0_i32_1 = arith.constant 0 : i32
    return %c0_i32, %c0_i32_0 : i32, i32
  }
  func.func @transform_7(%arg0: i32) -> (i32, i32) {
    %c0_i32 = arith.constant 0 : i32
    %c0_i32_0 = arith.constant 0 : i32
    return %arg0, %c0_i32 : i32, i32
  }
}

</mosaic_0001>

<llo_original>
// kernel: actor_forward.1
$region0: #{actor_forward.1}
  #allocation0 [shape = 'u32[]', space=smem, size = 0x4, offset = 0x4, fixed_abs, tag = 'smem constant byte address 0x4 - core index']
  #allocation1 [shape = 'u32[144,128]{1,0:T(1,128)}', space=vmem, size = 0x12000, scoped, tag = 'internal scratch']
  %s0 = inlined_call_operand.vmem [shape: f32[16,16], index: 0, kind: input, shape index: {}]
  %s1 = inlined_call_operand.vmem [shape: bf16[16,128], index: 1, kind: input, shape index: {}]
  %s2 = inlined_call_operand.vmem [shape: f32[1,128], index: 2, kind: input, shape index: {}]
  %s3 = inlined_call_operand.vmem [shape: bf16[128,128], index: 3, kind: input, shape index: {}]
  %s4 = inlined_call_operand.vmem [shape: f32[1,128], index: 4, kind: input, shape index: {}]
  %s5 = inlined_call_operand.vmem [shape: bf16[128,8], index: 5, kind: input, shape index: {}]
  %s6 = inlined_call_operand.vmem [shape: f32[1,8], index: 6, kind: input, shape index: {}]
  %s7 = inlined_call_operand.vmem [shape: f32[16,8], index: 7, kind: output, shape index: {}]
  %s8 = sld [smem:[#allocation0]]
  $region38: #{actor_forward.1} parent=0
    _
  %s10 = ssub.s32 1, %s8
  %s11 = scalar_select 0, %s10, %s8
  // Predicated region
  $region2: #{actor_forward.1} parent=0 // pred_check
    _
  $region3: #{actor_forward.1} parent=0 // pred_check_branch
    %13 = sbr.rel (0) target = $region5
  $region4: #{actor_forward.1} parent=0 // pred_region
    _
  $region5: #{actor_forward.1} parent=0 // pred_fallthru
    _
  // Predicated region
  $region6: #{actor_forward.1} parent=0 // pred_check
    _
  $region7: #{actor_forward.1} parent=0 // pred_check_branch
    %15 = sbr.rel (0) target = $region9
  $region8: #{actor_forward.1} parent=0 // pred_region
    _
  $region9: #{actor_forward.1} parent=0 // pred_fallthru
    _
  // Predicated region
  $region10: #{actor_forward.1} parent=0 // pred_check
    _
  $region11: #{actor_forward.1} parent=0 // pred_check_branch
    %17 = sbr.rel (0) target = $region13
  $region12: #{actor_forward.1} parent=0 // pred_region
    _
  $region13: #{actor_forward.1} parent=0 // pred_fallthru
    _
  // Predicated region
  $region14: #{actor_forward.1} parent=0 // pred_check
    _
  $region15: #{actor_forward.1} parent=0 // pred_check_branch
    %19 = sbr.rel (0) target = $region17
  $region16: #{actor_forward.1} parent=0 // pred_region
    _
  $region17: #{actor_forward.1} parent=0 // pred_fallthru
    _
  // Predicated region
  $region18: #{actor_forward.1} parent=0 // pred_check
    _
  $region19: #{actor_forward.1} parent=0 // pred_check_branch
    %21 = sbr.rel (0) target = $region21
  $region20: #{actor_forward.1} parent=0 // pred_region
    _
  $region21: #{actor_forward.1} parent=0 // pred_fallthru
    _
  // Predicated region
  $region22: #{actor_forward.1} parent=0 // pred_check
    _
  $region23: #{actor_forward.1} parent=0 // pred_check_branch
    %23 = sbr.rel (0) target = $region25
  $region24: #{actor_forward.1} parent=0 // pred_region
    _
  $region25: #{actor_forward.1} parent=0 // pred_fallthru
    _
  // Predicated region
  $region26: #{actor_forward.1} parent=0 // pred_check
    _
  $region27: #{actor_forward.1} parent=0 // pred_check_branch
    %25 = sbr.rel (0) target = $region29
  $region28: #{actor_forward.1} parent=0 // pred_region
    _
  $region29: #{actor_forward.1} parent=0 // pred_fallthru
    _
  %v27 = vld [vmem:[%s0] sm:$0xff]
  %v28 = vld [vmem:[%s0 + $0x8] sm:$0xff]
  %v29 = vpack.c.bf16 %v28, %v27
  %v30 = vld [vmem:[%s1] sm:$0xf]
  %v31 = vld [vmem:[%s1 + $0x4] sm:$0xf]
  %v32 = vld [vmem:[%s2] sm:$0x1]
  %v34 = vlaneseq
  %v35 = vshrl.u32 %v34, 7
  %v36 = vsub.s32 0, %v35
  %v37 = vrot.slane %v32, %v36
  %v41 = vunpack.c.l.b16 %v30
  %v42 = vunpack.c.l.b16 %v31
  %v43 = vpack.c.b16 %v42, %v41
  %vm45 = vcmask 130048
  %v47 = vsel %vm45, %v29, 0
  %49 = vmatprep.subr.bf16.mxu0 0
  %50 = vmatpush1.bf16.msra.mxu0 0
  %51 = vmatprep.subr.bf16.mxu0 0
  %52 = vmatpush1.bf16.msra.mxu0 0
  %53 = vmatprep.subr.bf16.mxu0 0
  %54 = vmatpush1.bf16.msra.mxu0 0
  %55 = vmatprep.subr.bf16.mxu0 0
  %56 = vmatpush1.bf16.msra.mxu0 0
  %57 = vmatprep.subr.bf16.mxu0 0
  %58 = vmatpush1.bf16.msra.mxu0 0
  %59 = vmatprep.subr.bf16.mxu0 0
  %60 = vmatpush1.bf16.msra.mxu0 0
  %61 = vmatprep.subr.bf16.mxu0 0
  %62 = vmatpush1.bf16.msra.mxu0 0
  %63 = vmatprep.subr.bf16.mxu0 0
  %64 = vmatpush1.bf16.msra.mxu0 %v43
  %65 = vmatprep.subr.bf16.mxu0 0
  %66 = vmatpush2.bf16.msra.mxu0 0
  %67 = vmatprep.subr.bf16.mxu0 0
  %68 = vmatpush2.bf16.msra.mxu0 0
  %69 = vmatprep.subr.bf16.mxu0 0
  %70 = vmatpush2.bf16.msra.mxu0 0
  %71 = vmatprep.subr.bf16.mxu0 0
  %72 = vmatpush2.bf16.msra.mxu0 0
  %73 = vmatprep.subr.bf16.mxu0 0
  %74 = vmatpush2.bf16.msra.mxu0 0
  %75 = vmatprep.subr.bf16.mxu0 0
  %76 = vmatpush2.bf16.msra.mxu0 0
  %77 = vmatprep.subr.bf16.mxu0 0
  %78 = vmatpush2.bf16.msra.mxu0 0
  %79 = vmatprep.subr.bf16.mxu0 0
  %80 = vmatpush2.bf16.msra.mxu0 0
  %81 = vmatprep.mubr.bf16.mxu0 0
  %82 = vmatmul.mubr.bf16.gmra.mxu0 %v47
  %v83 = vpop.f32.mrf.mxu0
  %v84 = vadd.f32 %v37, %v83
  %v85 = vpop.f32.mrf.mxu0
  %v86 = vpop.f32.mrf.mxu0
  %v87 = vadd.f32 %v37, %v86
  %v88 = vpop.f32.mrf.mxu0
  %89 = vdwg.mxu0
  %v90 = vmax.f32 %v84, 0.0
  %v91 = vmax.f32 %v87, 0.0
  %v92 = vpack.c.bf16 %v91, %v90
  %v93 = vld [vmem:[%s3] sm:$0xf]
  %v94 = vld [vmem:[%s3 + $0x4] sm:$0xf]
  %v95 = vld [vmem:[%s3 + $0x8] sm:$0xf]
  %v96 = vld [vmem:[%s3 + $0xc] sm:$0xf]
  %v97 = vld [vmem:[%s3 + $0x10] sm:$0xf]
  %v98 = vld [vmem:[%s3 + $0x14] sm:$0xf]
  %v99 = vld [vmem:[%s3 + $0x18] sm:$0xf]
  %v100 = vld [vmem:[%s3 + $0x1c] sm:$0xf]
  %v101 = vld [vmem:[%s3 + $0x20] sm:$0xf]
  %v102 = vld [vmem:[%s3 + $0x24] sm:$0xf]
  %v103 = vld [vmem:[%s3 + $0x28] sm:$0xf]
  %v104 = vld [vmem:[%s3 + $0x2c] sm:$0xf]
  %v105 = vld [vmem:[%s3 + $0x30] sm:$0xf]
  %v106 = vld [vmem:[%s3 + $0x34] sm:$0xf]
  %v107 = vld [vmem:[%s3 + $0x38] sm:$0xf]
  %v108 = vld [vmem:[%s3 + $0x3c] sm:$0xf]
  %v109 = vld [vmem:[%s4] sm:$0x1]
  %v111 = vlaneseq
  %v112 = vshrl.u32 %v111, 7
  %v113 = vsub.s32 0, %v112
  %v114 = vrot.slane %v109, %v113
  %v132 = vunpack.c.l.b16 %v93
  %v133 = vunpack.c.l.b16 %v94
  %v134 = vunpack.c.l.b16 %v95
  %v135 = vunpack.c.l.b16 %v96
  %v136 = vunpack.c.l.b16 %v97
  %v137 = vunpack.c.l.b16 %v98
  %v138 = vunpack.c.l.b16 %v99
  %v139 = vunpack.c.l.b16 %v100
  %v140 = vunpack.c.l.b16 %v101
  %v141 = vunpack.c.l.b16 %v102
  %v142 = vunpack.c.l.b16 %v103
  %v143 = vunpack.c.l.b16 %v104
  %v144 = vunpack.c.l.b16 %v105
  %v145 = vunpack.c.l.b16 %v106
  %v146 = vunpack.c.l.b16 %v107
  %v147 = vunpack.c.l.b16 %v108
  %v148 = vpack.c.b16 %v133, %v132
  %v149 = vpack.c.b16 %v135, %v134
  %v150 = vpack.c.b16 %v137, %v136
  %v151 = vpack.c.b16 %v139, %v138
  %v152 = vpack.c.b16 %v141, %v140
  %v153 = vpack.c.b16 %v143, %v142
  %v154 = vpack.c.b16 %v145, %v144
  %v155 = vpack.c.b16 %v147, %v146
  %164 = vmatprep.subr.bf16.mxu0 0
  %165 = vmatpush1.bf16.msra.mxu0 %v155
  %166 = vmatprep.subr.bf16.mxu0 0
  %167 = vmatpush1.bf16.msra.mxu0 %v154
  %168 = vmatprep.subr.bf16.mxu0 0
  %169 = vmatpush1.bf16.msra.mxu0 %v153
  %170 = vmatprep.subr.bf16.mxu0 0
  %171 = vmatpush1.bf16.msra.mxu0 %v152
  %172 = vmatprep.subr.bf16.mxu0 0
  %173 = vmatpush1.bf16.msra.mxu0 %v151
  %174 = vmatprep.subr.bf16.mxu0 0
  %175 = vmatpush1.bf16.msra.mxu0 %v150
  %176 = vmatprep.subr.bf16.mxu0 0
  %177 = vmatpush1.bf16.msra.mxu0 %v149
  %178 = vmatprep.subr.bf16.mxu0 0
  %179 = vmatpush1.bf16.msra.mxu0 %v148
  %180 = vmatprep.subr.bf16.mxu0 0
  %181 = vmatpush2.bf16.msra.mxu0 0
  %182 = vmatprep.subr.bf16.mxu0 0
  %183 = vmatpush2.bf16.msra.mxu0 0
  %184 = vmatprep.subr.bf16.mxu0 0
  %185 = vmatpush2.bf16.msra.mxu0 0
  %186 = vmatprep.subr.bf16.mxu0 0
  %187 = vmatpush2.bf16.msra.mxu0 0
  %188 = vmatprep.subr.bf16.mxu0 0
  %189 = vmatpush2.bf16.msra.mxu0 0
  %190 = vmatprep.subr.bf16.mxu0 0
  %191 = vmatpush2.bf16.msra.mxu0 0
  %192 = vmatprep.subr.bf16.mxu0 0
  %193 = vmatpush2.bf16.msra.mxu0 0
  %194 = vmatprep.subr.bf16.mxu0 0
  %195 = vmatpush2.bf16.msra.mxu0 0
  %196 = vmatprep.mubr.bf16.mxu0 0
  %197 = vmatmul.mubr.bf16.gmra.mxu0 %v92
  %v198 = vpop.f32.mrf.mxu0
  %v199 = vadd.f32 %v114, %v198
  %v200 = vpop.f32.mrf.mxu0
  %v201 = vpop.f32.mrf.mxu0
  %v202 = vadd.f32 %v114, %v201
  %v203 = vpop.f32.mrf.mxu0
  %204 = vdwg.mxu0
  %v205 = vmax.f32 %v199, 0.0
  %v206 = vmax.f32 %v202, 0.0
  %v207 = vpack.c.bf16 %v206, %v205
  %v208 = vld [vmem:[%s5] sm:$0xf]
  %v209 = vld [vmem:[%s5 + $0x4] sm:$0xf]
  %v210 = vld [vmem:[%s5 + $0x8] sm:$0xf]
  %v211 = vld [vmem:[%s5 + $0xc] sm:$0xf]
  %v212 = vld [vmem:[%s5 + $0x10] sm:$0xf]
  %v213 = vld [vmem:[%s5 + $0x14] sm:$0xf]
  %v214 = vld [vmem:[%s5 + $0x18] sm:$0xf]
  %v215 = vld [vmem:[%s5 + $0x1c] sm:$0xf]
  %v216 = vld [vmem:[%s5 + $0x20] sm:$0xf]
  %v217 = vld [vmem:[%s5 + $0x24] sm:$0xf]
  %v218 = vld [vmem:[%s5 + $0x28] sm:$0xf]
  %v219 = vld [vmem:[%s5 + $0x2c] sm:$0xf]
  %v220 = vld [vmem:[%s5 + $0x30] sm:$0xf]
  %v221 = vld [vmem:[%s5 + $0x34] sm:$0xf]
  %v222 = vld [vmem:[%s5 + $0x38] sm:$0xf]
  %v223 = vld [vmem:[%s5 + $0x3c] sm:$0xf]
  %v224 = vld [vmem:[%s6] sm:$0x1]
  %v226 = vlaneseq
  %v227 = vshrl.u32 %v226, 7
  %v228 = vsub.s32 0, %v227
  %v229 = vrot.slane %v224, %v228
  %v247 = vunpack.c.l.b16 %v208
  %v248 = vunpack.c.l.b16 %v209
  %v249 = vunpack.c.l.b16 %v210
  %v250 = vunpack.c.l.b16 %v211
  %v251 = vunpack.c.l.b16 %v212
  %v252 = vunpack.c.l.b16 %v213
  %v253 = vunpack.c.l.b16 %v214
  %v254 = vunpack.c.l.b16 %v215
  %v255 = vunpack.c.l.b16 %v216
  %v256 = vunpack.c.l.b16 %v217
  %v257 = vunpack.c.l.b16 %v218
  %v258 = vunpack.c.l.b16 %v219
  %v259 = vunpack.c.l.b16 %v220
  %v260 = vunpack.c.l.b16 %v221
  %v261 = vunpack.c.l.b16 %v222
  %v262 = vunpack.c.l.b16 %v223
  %v263 = vpack.c.b16 %v248, %v247
  %v264 = vpack.c.b16 %v250, %v249
  %v265 = vpack.c.b16 %v252, %v251
  %v266 = vpack.c.b16 %v254, %v253
  %v267 = vpack.c.b16 %v256, %v255
  %v268 = vpack.c.b16 %v258, %v257
  %v269 = vpack.c.b16 %v260, %v259
  %v270 = vpack.c.b16 %v262, %v261
  %279 = vmatprep.subr.bf16.mxu0 0
  %280 = vmatpush1.bf16.msra.mxu0 %v270
  %281 = vmatprep.subr.bf16.mxu0 0
  %282 = vmatpush1.bf16.msra.mxu0 %v269
  %283 = vmatprep.subr.bf16.mxu0 0
  %284 = vmatpush1.bf16.msra.mxu0 %v268
  %285 = vmatprep.subr.bf16.mxu0 0
  %286 = vmatpush1.bf16.msra.mxu0 %v267
  %287 = vmatprep.subr.bf16.mxu0 0
  %288 = vmatpush1.bf16.msra.mxu0 %v266
  %289 = vmatprep.subr.bf16.mxu0 0
  %290 = vmatpush1.bf16.msra.mxu0 %v265
  %291 = vmatprep.subr.bf16.mxu0 0
  %292 = vmatpush1.bf16.msra.mxu0 %v264
  %293 = vmatprep.subr.bf16.mxu0 0
  %294 = vmatpush1.bf16.msra.mxu0 %v263
  %295 = vmatprep.subr.bf16.mxu0 0
  %296 = vmatpush2.bf16.msra.mxu0 0
  %297 = vmatprep.subr.bf16.mxu0 0
  %298 = vmatpush2.bf16.msra.mxu0 0
  %299 = vmatprep.subr.bf16.mxu0 0
  %300 = vmatpush2.bf16.msra.mxu0 0
  %301 = vmatprep.subr.bf16.mxu0 0
  %302 = vmatpush2.bf16.msra.mxu0 0
  %303 = vmatprep.subr.bf16.mxu0 0
  %304 = vmatpush2.bf16.msra.mxu0 0
  %305 = vmatprep.subr.bf16.mxu0 0
  %306 = vmatpush2.bf16.msra.mxu0 0
  %307 = vmatprep.subr.bf16.mxu0 0
  %308 = vmatpush2.bf16.msra.mxu0 0
  %309 = vmatprep.subr.bf16.mxu0 0
  %310 = vmatpush2.bf16.msra.mxu0 0
  %311 = vmatprep.mubr.bf16.mxu0 0
  %312 = vmatmul.mubr.bf16.gmra.mxu0 %v207
  %v313 = vpop.f32.mrf.mxu0
  %v314 = vadd.f32 %v229, %v313
  %v315 = vpop.f32.mrf.mxu0
  %v316 = vpop.f32.mrf.mxu0
  %v317 = vadd.f32 %v229, %v316
  %v318 = vpop.f32.mrf.mxu0
  %319 = vdwg.mxu0
  %v320 = vtanh.pop %v314
  %v321 = vtanh.pop %v317
  %vm322 = vcmask 64512
  %323 = vst.msk [vmem:[%s7] sm:$0xff] %vm322, %v320
  %324 = vst.msk [vmem:[%s7 + $0x8] sm:$0xff] %vm322, %v321
  // Predicated region
  $region30: #{actor_forward.1} parent=0 // pred_check
    _
  $region31: #{actor_forward.1} parent=0 // pred_check_branch
    %326 = sbr.rel (0) target = $region33
  $region32: #{actor_forward.1} parent=0 // pred_region
    _
  $region33: #{actor_forward.1} parent=0 // pred_fallthru
    _
  // Predicated region
  $region34: #{actor_forward.1} parent=0 // pred_check
    _
  $region35: #{actor_forward.1} parent=0 // pred_check_branch
    %328 = sbr.rel (0) target = $region37
  $region36: #{actor_forward.1} parent=0 // pred_region
    _
  $region37: #{actor_forward.1} parent=0 // pred_fallthru
    _

</llo_original>
